<compile_context>
chip_gen: v7x
topology: tpu7x:2x2x1
jax: 0.10.0
libtpu: 0.0.40
codegen_flags: <defaults>
</compile_context>

<pallas_src>
import jax
import jax.numpy as jnp
from jax.experimental import pallas as pl
from jax.experimental.pallas import tpu as pltpu

EPS = 1e-6


def _round_up(a: int, m: int) -> int:
    return ((a + m - 1) // m) * m


def residual_connection_kernel(alpha_ref, beta_ref, x_ref, w_ref, b_ref, o_ref):
    # x_ref: (TILE, D) f32   w_ref: (D, D) bf16   b_ref: (1, D) f32
    x = x_ref[...].astype(jnp.float32)                     # x.float()
    d = x.shape[-1]

    # LayerNorm with scalar alpha/bias, torch x.std() semantics
    # (unbiased variance, eps added to std — matches the PyTorch module).
    mean = jnp.mean(x, axis=-1, keepdims=True)
    xc = x - mean
    var = jnp.sum(xc * xc, axis=-1, keepdims=True) * (1.0 / (d - 1))
    std = jnp.sqrt(var)
    inv_std = pl.reciprocal(std + EPS, approx=True)        # EUP slot, off the VALU path
    normed = alpha_ref[0] * (xc * inv_std) + beta_ref[0]

    # sublayer := Linear(D, D).  bf16 operands on the MXU, f32 accumulation.
    y = jnp.dot(normed.astype(jnp.bfloat16), w_ref[...],
                preferred_element_type=jnp.float32) + b_ref[...]

    # TODO(synk): nn.Dropout is identity at inference; training-mode dropout
    # would use pltpu.prng_seed / pltpu.prng_random_bits to build a keep-mask.

    # residual add (f32)
    o_ref[...] = x + y


def residual_connection(x, w, b, alpha, beta, *, tile_rows=256):
    """x: (B, S, D). w: (D, D), b: (D,), alpha/beta: (1,). Returns (B, S, D) f32."""
    B, S, D = x.shape
    rows = B * S

    # Row tiling: large tiles amortize per-grid-step overhead and give the MXU a
    # tall LHS.  Pad rows to a tile multiple instead of asserting divisibility.
    tile = min(tile_rows, _round_up(rows, 8))
    tile = _round_up(tile, 8)
    rows_p = _round_up(rows, tile)

    x2 = x.reshape(rows, D).astype(jnp.float32)
    if rows_p != rows:
        x2 = jnp.pad(x2, ((0, rows_p - rows), (0, 0)))

    # Weight resident in VMEM as bf16 (halves HBM traffic and VMEM footprint).
    # TODO(synk): for realistic d_model >= 2048 on v7x (64 MiB VMEM), tile W over
    # its output columns with a second grid axis instead of keeping it resident.
    w_bf = w.astype(jnp.bfloat16)
    b2 = b.reshape(1, D).astype(jnp.float32)

    grid = (rows_p // tile,)

    # VMEM budget: double-buffered x/out tiles + resident bf16 W + bias row,
    # with headroom; clamped to a limit that is safe on v5e/v6e/v7x.
    vmem_needed = 2 * (2 * tile * D * 4) + 2 * D * D * 2 + 2 * D * 4
    vmem_limit = int(min(max(2 * vmem_needed, 16 * 1024 * 1024), 32 * 1024 * 1024))

    cost = pl.CostEstimate(
        flops=2 * rows_p * D * D,
        transcendentals=rows_p,                        # one reciprocal per row
        bytes_accessed=2 * rows_p * D * 4 + D * D * 2 + D * 4,
    )

    out = pl.pallas_call(
        residual_connection_kernel,
        out_shape=jax.ShapeDtypeStruct((rows_p, D), jnp.float32),
        grid_spec=pl.GridSpec(
            grid=grid,
            in_specs=[
                pl.BlockSpec(memory_space=pltpu.SMEM),           # alpha (1,)
                pl.BlockSpec(memory_space=pltpu.SMEM),           # beta  (1,)
                pl.BlockSpec((tile, D), lambda i: (i, 0)),       # x row tile
                pl.BlockSpec((D, D), lambda i: (0, 0)),          # W (resident)
                pl.BlockSpec((1, D), lambda i: (0, 0)),          # bias row
            ],
            out_specs=pl.BlockSpec((tile, D), lambda i: (i, 0)),
        ),
        compiler_params=pltpu.CompilerParams(
            dimension_semantics=("parallel",),   # row tiles shard across TCs (v7x megacore)
            vmem_limit_bytes=vmem_limit,
        ),
        cost_estimate=cost,
    )(alpha, beta, x2, w_bf, b2)

    return out[:rows].reshape(B, S, D)


def _reference(x, w, b, alpha, beta):
    xf = x.astype(jnp.float32)
    d = xf.shape[-1]
    mean = jnp.mean(xf, axis=-1, keepdims=True)
    var = jnp.sum((xf - mean) ** 2, axis=-1, keepdims=True) / (d - 1)
    std = jnp.sqrt(var)
    normed = alpha[0] * (xf - mean) / (std + EPS) + beta[0]
    y = jnp.dot(normed, w, precision=jax.lax.Precision.HIGHEST) + b
    return xf + y


def _run_case(key, B, S, D, alpha_val, beta_val, tile_rows):
    kx, kw, kb = jax.random.split(key, 3)
    x = jax.random.normal(kx, (B, S, D), dtype=jnp.float32)
    # Deterministic sublayer (Linear) parameters.
    w = jax.random.normal(kw, (D, D), dtype=jnp.float32) * (1.0 / D ** 0.5)
    b = jax.random.normal(kb, (D,), dtype=jnp.float32) * 0.01
    # LayerNorm scalar params.
    alpha = jnp.full((1,), alpha_val, dtype=jnp.float32)
    beta = jnp.full((1,), beta_val, dtype=jnp.float32)

    out = residual_connection(x, w, b, alpha, beta, tile_rows=tile_rows)
    out = jax.block_until_ready(out)
    ref = _reference(x, w, b, alpha, beta)

    assert out.shape == (B, S, D)
    # bf16 matmul operands + approx reciprocal => loosened tolerance vs pure-f32 ref.
    err = float(jnp.max(jnp.abs(out - ref)))
    assert jnp.allclose(out, ref, atol=3e-2, rtol=3e-2), \
        f"mismatch vs reference (max abs err {err:.3e})"


if __name__ == "__main__":
    key = jax.random.PRNGKey(0)
    k1, k2 = jax.random.split(key)

    # d_model = 512, matching the module's LayerNorm default.
    _run_case(k1, B=2, S=8, D=512, alpha_val=1.0, beta_val=0.0, tile_rows=256)
    # Exercises the multi-tile grid and the non-divisible-rows padding path.
    _run_case(k2, B=2, S=200, D=512, alpha_val=1.3, beta_val=0.2, tile_rows=256)

    print("KERNEL_OK")
</pallas_src>

<mosaic_0001>
module attributes {stable_mosaic.version = 11 : i64} {
  func.func @residual_connection_kernel(%arg0: i32, %arg1: memref<1xf32, #tpu.memory_space<smem>>, %arg2: memref<1xf32, #tpu.memory_space<smem>>, %arg3: memref<16x512xf32, #tpu.memory_space<vmem>>, %arg4: memref<512x512xbf16, #tpu.memory_space<vmem>>, %arg5: memref<1x512xf32, #tpu.memory_space<vmem>>, %arg6: memref<16x512xf32, #tpu.memory_space<vmem>>) attributes {dimension_semantics = [#tpu.dimension_semantics<parallel>], iteration_bounds = array<i64: 1>, scalar_prefetch = 0 : i64, scratch_operands = 0 : i64, tpu.core_type = #tpu.core_type<tc>, window_params = [{transform_indices = @transform_0, window_bounds = array<i64: 1>}, {transform_indices = @transform_1, window_bounds = array<i64: 1>}, {transform_indices = @transform_2, window_bounds = array<i64: 16, 512>}, {pipeline_mode = #tpu.pipeline_mode<synchronous>, transform_indices = @transform_3, window_bounds = array<i64: 512, 512>}, {pipeline_mode = #tpu.pipeline_mode<synchronous>, transform_indices = @transform_4, window_bounds = array<i64: 1, 512>}, {transform_indices = @transform_5, window_bounds = array<i64: 16, 512>}]} {
    %c0 = arith.constant 0 : index
    %c0_0 = arith.constant 0 : index
    %0 = vector.load %arg3[%c0, %c0_0] : memref<16x512xf32, #tpu.memory_space<vmem>>, vector<16x512xf32>
    %cst = arith.constant dense<0.000000e+00> : vector<16xf32>
    %1 = vector.multi_reduction <add>, %0, %cst [1] : vector<16x512xf32> to vector<16xf32>
    %2 = vector.shape_cast %1 : vector<16xf32> to vector<16x1xf32>
    %cst_1 = arith.constant 5.120000e+02 : f32
    %3 = vector.broadcast %cst_1 : f32 to vector<16x1xf32>
    %4 = arith.divf %2, %3 : vector<16x1xf32>
    %5 = vector.broadcast %4 : vector<16x1xf32> to vector<16x512xf32>
    %6 = arith.subf %0, %5 : vector<16x512xf32>
    %7 = arith.mulf %6, %6 : vector<16x512xf32>
    %cst_2 = arith.constant dense<0.000000e+00> : vector<16xf32>
    %8 = vector.multi_reduction <add>, %7, %cst_2 [1] : vector<16x512xf32> to vector<16xf32>
    %9 = vector.shape_cast %8 : vector<16xf32> to vector<16x1xf32>
    %cst_3 = arith.constant 0.00195694715 : f32
    %10 = vector.broadcast %cst_3 : f32 to vector<16x1xf32>
    %11 = arith.mulf %9, %10 : vector<16x1xf32>
    %12 = math.sqrt %11 : vector<16x1xf32>
    %cst_4 = arith.constant 9.99999997E-7 : f32
    %13 = vector.broadcast %cst_4 : f32 to vector<16x1xf32>
    %14 = arith.addf %12, %13 : vector<16x1xf32>
    %15 = tpu.reciprocal %14 {approx = true} : vector<16x1xf32> -> vector<16x1xf32>
    %c0_5 = arith.constant 0 : index
    %16 = memref.load %arg1[%c0_5] : memref<1xf32, #tpu.memory_space<smem>>
    %17 = vector.broadcast %15 : vector<16x1xf32> to vector<16x512xf32>
    %18 = arith.mulf %6, %17 : vector<16x512xf32>
    %19 = vector.broadcast %16 : f32 to vector<16x512xf32>
    %20 = arith.mulf %19, %18 : vector<16x512xf32>
    %c0_6 = arith.constant 0 : index
    %21 = memref.load %arg2[%c0_6] : memref<1xf32, #tpu.memory_space<smem>>
    %22 = vector.broadcast %21 : f32 to vector<16x512xf32>
    %23 = arith.addf %20, %22 : vector<16x512xf32>
    %24 = arith.truncf %23 : vector<16x512xf32> to vector<16x512xbf16>
    %c0_7 = arith.constant 0 : index
    %c0_8 = arith.constant 0 : index
    %25 = vector.load %arg4[%c0_7, %c0_8] : memref<512x512xbf16, #tpu.memory_space<vmem>>, vector<512x512xbf16>
    %cst_9 = arith.constant dense<0.000000e+00> : vector<16x512xf32>
    %26 = tpu.matmul %24, %25, %cst_9 {dimension_numbers = #tpu.dot_dimension_numbers<[1], [0], [0], [1], [0, 0, 1, 1], [], []>} : vector<16x512xbf16>, vector<512x512xbf16>, vector<16x512xf32> -> vector<16x512xf32>
    %c0_10 = arith.constant 0 : index
    %c0_11 = arith.constant 0 : index
    %27 = vector.load %arg5[%c0_10, %c0_11] : memref<1x512xf32, #tpu.memory_space<vmem>>, vector<1x512xf32>
    %28 = vector.broadcast %27 : vector<1x512xf32> to vector<16x512xf32>
    %29 = arith.addf %26, %28 : vector<16x512xf32>
    %30 = arith.addf %0, %29 : vector<16x512xf32>
    %c0_12 = arith.constant 0 : index
    %c0_13 = arith.constant 0 : index
    %31 = vector.load %arg6[%c0_12, %c0_13] : memref<16x512xf32, #tpu.memory_space<vmem>>, vector<16x512xf32>
    tpu.vector_store %arg6[%c0_12, %c0_13], %30 {strides = array<i32>} : memref<16x512xf32, #tpu.memory_space<vmem>>, vector<16x512xf32>,
    return
  }
  func.func @transform_0(%arg0: i32) -> i32 {
    %c0_i32 = arith.constant 0 : i32
    %c0_i32_0 = arith.constant 0 : i32
    return %c0_i32 : i32
  }
  func.func @transform_1(%arg0: i32) -> i32 {
    %c0_i32 = arith.constant 0 : i32
    %c0_i32_0 = arith.constant 0 : i32
    return %c0_i32 : i32
  }
  func.func @transform_2(%arg0: i32) -> (i32, i32) {
    %c0_i32 = arith.constant 0 : i32
    %c0_i32_0 = arith.constant 0 : i32
    return %arg0, %c0_i32 : i32, i32
  }
  func.func @transform_3(%arg0: i32) -> (i32, i32) {
    %c0_i32 = arith.constant 0 : i32
    %c0_i32_0 = arith.constant 0 : i32
    %c0_i32_1 = arith.constant 0 : i32
    return %c0_i32, %c0_i32_0 : i32, i32
  }
  func.func @transform_4(%arg0: i32) -> (i32, i32) {
    %c0_i32 = arith.constant 0 : i32
    %c0_i32_0 = arith.constant 0 : i32
    %c0_i32_1 = arith.constant 0 : i32
    return %c0_i32, %c0_i32_0 : i32, i32
  }
  func.func @transform_5(%arg0: i32) -> (i32, i32) {
    %c0_i32 = arith.constant 0 : i32
    %c0_i32_0 = arith.constant 0 : i32
    return %arg0, %c0_i32 : i32, i32
  }
}

</mosaic_0001>

<llo_original>
// kernel: tpu_custom_call.1
$region0: #{tpu_custom_call.1}
  #allocation0 [shape = 'u32[]', space=smem, size = 0x4, offset = 0x4, fixed_abs, tag = 'smem constant byte address 0x4 - core index']
  #allocation1 [shape = 'u32[144,128]{1,0:T(1,128)}', space=vmem, size = 0x12000, scoped, tag = 'internal scratch']
  #allocation2 [shape = 'f32[1]{0:T(128)S(6)}', space=smem, size = 0x200, scoped, tag = 'scoped memory for tpu_custom_call.1']
  #allocation3 [shape = 'f32[1]{0:T(128)S(6)}', space=smem, size = 0x200, scoped, tag = 'scoped memory for tpu_custom_call.1']
  %s0 = inlined_call_operand.<no memory space> [shape: f32[1], index: 0, kind: input, shape index: {}]
  %s1 = inlined_call_operand.<no memory space> [shape: f32[1], index: 1, kind: input, shape index: {}]
  %s2 = inlined_call_operand.hbm [shape: f32[16,512], index: 2, kind: input, shape index: {}]
  %s3 = inlined_call_operand.hbm [shape: bf16[512,512], index: 3, kind: input, shape index: {}]
  %s4 = inlined_call_operand.vmem [shape: f32[1,512], index: 4, kind: input, shape index: {}]
  %s5 = inlined_call_operand.hbm [shape: f32[16,512], index: 5, kind: output, shape index: {}]
  %s6 = sld [smem:[#allocation0]]
  $region38: #{tpu_custom_call.1} parent=0
    _
  %s8 = ssub.s32 1, %s6
  %s9 = scalar_select 0, %s8, %s6
  %10 = sst [smem:[#allocation2]] %s0
  %11 = sst [smem:[#allocation3]] %s1
  $region1: #{tpu_custom_call.1} parent=0
    #allocation4 [shape = 'u8[32768]{0}', space=vmem, size = 0x8000, scoped, tag = 'input window, operand 2, single buffered']
    #allocation5 [shape = 's32[1]{0}', space=sflag, size = 0x4, scoped, tag = 'scoped memory for tpu_custom_call.1']
    #allocation6 [shape = 's32[1]{0}', space=sflag, size = 0x4, scoped, tag = 'scoped memory for tpu_custom_call.1']
    #allocation7 [shape = 'u8[524288]{0}', space=vmem, size = 0x80000, scoped, tag = 'input window, operand 3, single buffered']
    #allocation8 [shape = 's32[1]{0}', space=sflag, size = 0x4, scoped, tag = 'scoped memory for tpu_custom_call.1']
    #allocation9 [shape = 'u8[32768]{0}', space=vmem, size = 0x8000, scoped, tag = 'output window, operand 0, single buffered']
    %12 = vsyncpa [#allocation5], 0
    %13 = vsyncpa [#allocation8], 0
    %14 = vsyncpa [#allocation6], 0
    // Predicated region
    $region2: #{tpu_custom_call.1} parent=1 // pred_check
      _
    $region3: #{tpu_custom_call.1} parent=1 // pred_check_branch
      %16 = sbr.rel (0) target = $region5
    $region4: #{tpu_custom_call.1} parent=1 // pred_region
      _
    $region5: #{tpu_custom_call.1} parent=1 // pred_fallthru
      _
    // Predicated region
    $region6: #{tpu_custom_call.1} parent=1 // pred_check
      _
    $region7: #{tpu_custom_call.1} parent=1 // pred_check_branch
      %18 = sbr.rel (0) target = $region9
    $region8: #{tpu_custom_call.1} parent=1 // pred_region
      _
    $region9: #{tpu_custom_call.1} parent=1 // pred_fallthru
      _
    // Predicated region
    $region10: #{tpu_custom_call.1} parent=1 // pred_check
      _
    $region11: #{tpu_custom_call.1} parent=1 // pred_check_branch
      %20 = sbr.rel (0) target = $region13
    $region12: #{tpu_custom_call.1} parent=1 // pred_region
      %s22 = ssub.s32 1024, 1024
      %23 = vsyncadd [#allocation5], %s22
      %s24 = sshll.u32 [#allocation4], 4
      %s25 = int_to_ptr.vmem [resolvable:$true] %s24
      %30 = dma.hbm_to_vmem [thread:$0]  %s2, 1024, %s25, [#allocation5], 512, 512, 32
    $region13: #{tpu_custom_call.1} parent=1 // pred_fallthru
      _
    // Predicated region
    $region14: #{tpu_custom_call.1} parent=1 // pred_check
      _
    $region15: #{tpu_custom_call.1} parent=1 // pred_check_branch
      %32 = sbr.rel (0) target = $region17
    $region16: #{tpu_custom_call.1} parent=1 // pred_region
      %s34 = ssub.s32 16384, 16384
      %35 = vsyncadd [#allocation8], %s34
      %s36 = sshll.u32 [#allocation7], 4
      %s37 = int_to_ptr.vmem [resolvable:$true] %s36
      %42 = dma.hbm_to_vmem [thread:$0]  %s3, 16384, %s37, [#allocation8], 256, 256, 16
    $region17: #{tpu_custom_call.1} parent=1 // pred_fallthru
      _
    // Predicated region
    $region18: #{tpu_custom_call.1} parent=1 // pred_check
      _
    $region19: #{tpu_custom_call.1} parent=1 // pred_check_branch
      %44 = sbr.rel (0) target = $region21
    $region20: #{tpu_custom_call.1} parent=1 // pred_region
      _
    $region21: #{tpu_custom_call.1} parent=1 // pred_fallthru
      _
    // Predicated region
    $region22: #{tpu_custom_call.1} parent=1 // pred_check
      _
    $region23: #{tpu_custom_call.1} parent=1 // pred_check_branch
      %46 = sbr.rel (0) target = $region25
    $region24: #{tpu_custom_call.1} parent=1 // pred_region
      %47 = dma.done [#allocation5], 1024
    $region25: #{tpu_custom_call.1} parent=1 // pred_fallthru
      _
    // Predicated region
    $region26: #{tpu_custom_call.1} parent=1 // pred_check
      _
    $region27: #{tpu_custom_call.1} parent=1 // pred_check_branch
      %49 = sbr.rel (0) target = $region29
    $region28: #{tpu_custom_call.1} parent=1 // pred_region
      %50 = dma.done [#allocation8], 16384
    $region29: #{tpu_custom_call.1} parent=1 // pred_fallthru
      _
    %v51 = vld [vmem:[#allocation4] sm:$0xff]
    %v52 = vld [vmem:[#allocation4 + $0x8] sm:$0xff]
    %v53 = vld [vmem:[#allocation4 + $0x10] sm:$0xff]
    %v54 = vld [vmem:[#allocation4 + $0x18] sm:$0xff]
    %v55 = vld [vmem:[#allocation4 + $0x20] sm:$0xff]
    %v56 = vld [vmem:[#allocation4 + $0x28] sm:$0xff]
    %v57 = vld [vmem:[#allocation4 + $0x30] sm:$0xff]
    %v58 = vld [vmem:[#allocation4 + $0x38] sm:$0xff]
    %v59 = vadd.f32 %v51, %v52
    %v60 = vadd.f32 %v59, %v53
    %v61 = vadd.f32 %v60, %v54
    %62 = vadd.xlane.f32.xlu0 %v61
    %v63 = vpop.xlane.xlu0 %62
    %v64 = vadd.f32 %v55, %v56
    %v65 = vadd.f32 %v64, %v57
    %v66 = vadd.f32 %v65, %v58
    %67 = vadd.xlane.f32.xlu0 %v66
    %v68 = vpop.xlane.xlu0 %67
    %v69 = vrcp.pop 512.0
    %v70 = vmul.f32 %v63, %v69
    %v71 = vmul.f32 %v68, %v69
    %v72 = vsub.f32 %v51, %v70
    %v73 = vsub.f32 %v52, %v70
    %v74 = vsub.f32 %v53, %v70
    %v75 = vsub.f32 %v54, %v70
    %v76 = vsub.f32 %v55, %v71
    %v77 = vsub.f32 %v56, %v71
    %v78 = vsub.f32 %v57, %v71
    %v79 = vsub.f32 %v58, %v71
    %v80 = vmul.f32 %v72, %v72
    %v81 = vmul.f32 %v73, %v73
    %v82 = vmul.f32 %v74, %v74
    %v83 = vmul.f32 %v75, %v75
    %v84 = vmul.f32 %v76, %v76
    %v85 = vmul.f32 %v77, %v77
    %v86 = vmul.f32 %v78, %v78
    %v87 = vmul.f32 %v79, %v79
    %v88 = vadd.f32 %v80, %v81
    %v89 = vadd.f32 %v88, %v82
    %v90 = vadd.f32 %v89, %v83
    %91 = vadd.xlane.f32.xlu0 %v90
    %v92 = vpop.xlane.xlu0 %91
    %v93 = vadd.f32 %v84, %v85
    %v94 = vadd.f32 %v93, %v86
    %v95 = vadd.f32 %v94, %v87
    %96 = vadd.xlane.f32.xlu0 %v95
    %v97 = vpop.xlane.xlu0 %96
    %v98 = vmul.f32 %v92, 0.0019569471
    %v99 = vmul.f32 %v97, 0.0019569471
    %v100 = vrsqrt.pop %v98
    %v101 = vmul.f32 %v98, %v100
    %vm102 = vcmp.eq.f32.partialorder %v98, inf
    %v103 = vsel %vm102, %v98, %v101
    %vm104 = vcmp.eq.f32.partialorder %v98, 0.0
    %v105 = vand.u32 %v98, 2147483648
    %v106 = vsel %vm104, %v105, %v103
    %v107 = vrsqrt.pop %v99
    %v108 = vmul.f32 %v99, %v107
    %vm109 = vcmp.eq.f32.partialorder %v99, inf
    %v110 = vsel %vm109, %v99, %v108
    %vm111 = vcmp.eq.f32.partialorder %v99, 0.0
    %v112 = vand.u32 %v99, 2147483648
    %v113 = vsel %vm111, %v112, %v110
    %v114 = vadd.f32 %v106, 1e-06
    %v115 = vadd.f32 %v113, 1e-06
    %v116 = vrcp.pop %v114
    %v117 = vrcp.pop %v115
    %s118 = sld [smem:[#allocation2]]
    %v119 = vmul.f32 %v72, %v116
    %v120 = vmul.f32 %v73, %v116
    %v121 = vmul.f32 %v74, %v116
    %v122 = vmul.f32 %v75, %v116
    %v123 = vmul.f32 %v76, %v117
    %v124 = vmul.f32 %v77, %v117
    %v125 = vmul.f32 %v78, %v117
    %v126 = vmul.f32 %v79, %v117
    %v127 = vstv %s118
    %v128 = vmul.f32 %v127, %v119
    %v129 = vmul.f32 %v127, %v120
    %v130 = vmul.f32 %v127, %v121
    %v131 = vmul.f32 %v127, %v122
    %v132 = vmul.f32 %v127, %v123
    %v133 = vmul.f32 %v127, %v124
    %v134 = vmul.f32 %v127, %v125
    %v135 = vmul.f32 %v127, %v126
    %s136 = sld [smem:[#allocation3]]
    %v137 = vstv %s136
    %v138 = vadd.f32 %v128, %v137
    %v139 = vadd.f32 %v129, %v137
    %v140 = vadd.f32 %v130, %v137
    %v141 = vadd.f32 %v131, %v137
    %v142 = vadd.f32 %v132, %v137
    %v143 = vadd.f32 %v133, %v137
    %v144 = vadd.f32 %v134, %v137
    %v145 = vadd.f32 %v135, %v137
    %v146 = vpack.c.bf16 %v142, %v138
    %v147 = vpack.c.bf16 %v143, %v139
    %v148 = vpack.c.bf16 %v144, %v140
    %v149 = vpack.c.bf16 %v145, %v141
    %v150 = vld [vmem:[#allocation7] sm:$0xff]
    %v151 = vld [vmem:[#allocation7 + $0x8] sm:$0xff]
    %v152 = vld [vmem:[#allocation7 + $0x10] sm:$0xff]
    %v153 = vld [vmem:[#allocation7 + $0x18] sm:$0xff]
    %v154 = vld [vmem:[#allocation7 + $0x20] sm:$0xff]
    %v155 = vld [vmem:[#allocation7 + $0x28] sm:$0xff]
    %v156 = vld [vmem:[#allocation7 + $0x30] sm:$0xff]
    %v157 = vld [vmem:[#allocation7 + $0x38] sm:$0xff]
    %v158 = vld [vmem:[#allocation7 + $0x40] sm:$0xff]
    %v159 = vld [vmem:[#allocation7 + $0x48] sm:$0xff]
    %v160 = vld [vmem:[#allocation7 + $0x50] sm:$0xff]
    %v161 = vld [vmem:[#allocation7 + $0x58] sm:$0xff]
    %v162 = vld [vmem:[#allocation7 + $0x60] sm:$0xff]
    %v163 = vld [vmem:[#allocation7 + $0x68] sm:$0xff]
    %v164 = vld [vmem:[#allocation7 + $0x70] sm:$0xff]
    %v165 = vld [vmem:[#allocation7 + $0x78] sm:$0xff]
    %v166 = vld [vmem:[#allocation7 + $0x80] sm:$0xff]
    %v167 = vld [vmem:[#allocation7 + $0x88] sm:$0xff]
    %v168 = vld [vmem:[#allocation7 + $0x90] sm:$0xff]
    %v169 = vld [vmem:[#allocation7 + $0x98] sm:$0xff]
    %v170 = vld [vmem:[#allocation7 + $0xa0] sm:$0xff]
    %v171 = vld [vmem:[#allocation7 + $0xa8] sm:$0xff]
    %v172 = vld [vmem:[#allocation7 + $0xb0] sm:$0xff]
    %v173 = vld [vmem:[#allocation7 + $0xb8] sm:$0xff]
    %v174 = vld [vmem:[#allocation7 + $0xc0] sm:$0xff]
    %v175 = vld [vmem:[#allocation7 + $0xc8] sm:$0xff]
    %v176 = vld [vmem:[#allocation7 + $0xd0] sm:$0xff]
    %v177 = vld [vmem:[#allocation7 + $0xd8] sm:$0xff]
    %v178 = vld [vmem:[#allocation7 + $0xe0] sm:$0xff]
    %v179 = vld [vmem:[#allocation7 + $0xe8] sm:$0xff]
    %v180 = vld [vmem:[#allocation7 + $0xf0] sm:$0xff]
    %v181 = vld [vmem:[#allocation7 + $0xf8] sm:$0xff]
    %v182 = vld [vmem:[#allocation7 + $0x100] sm:$0xff]
    %v183 = vld [vmem:[#allocation7 + $0x108] sm:$0xff]
    %v184 = vld [vmem:[#allocation7 + $0x110] sm:$0xff]
    %v185 = vld [vmem:[#allocation7 + $0x118] sm:$0xff]
    %v186 = vld [vmem:[#allocation7 + $0x120] sm:$0xff]
    %v187 = vld [vmem:[#allocation7 + $0x128] sm:$0xff]
    %v188 = vld [vmem:[#allocation7 + $0x130] sm:$0xff]
    %v189 = vld [vmem:[#allocation7 + $0x138] sm:$0xff]
    %v190 = vld [vmem:[#allocation7 + $0x140] sm:$0xff]
    %v191 = vld [vmem:[#allocation7 + $0x148] sm:$0xff]
    %v192 = vld [vmem:[#allocation7 + $0x150] sm:$0xff]
    %v193 = vld [vmem:[#allocation7 + $0x158] sm:$0xff]
    %v194 = vld [vmem:[#allocation7 + $0x160] sm:$0xff]
    %v195 = vld [vmem:[#allocation7 + $0x168] sm:$0xff]
    %v196 = vld [vmem:[#allocation7 + $0x170] sm:$0xff]
    %v197 = vld [vmem:[#allocation7 + $0x178] sm:$0xff]
    %v198 = vld [vmem:[#allocation7 + $0x180] sm:$0xff]
    %v199 = vld [vmem:[#allocation7 + $0x188] sm:$0xff]
    %v200 = vld [vmem:[#allocation7 + $0x190] sm:$0xff]
    %v201 = vld [vmem:[#allocation7 + $0x198] sm:$0xff]
    %v202 = vld [vmem:[#allocation7 + $0x1a0] sm:$0xff]
    %v203 = vld [vmem:[#allocation7 + $0x1a8] sm:$0xff]
    %v204 = vld [vmem:[#allocation7 + $0x1b0] sm:$0xff]
    %v205 = vld [vmem:[#allocation7 + $0x1b8] sm:$0xff]
    %v206 = vld [vmem:[#allocation7 + $0x1c0] sm:$0xff]
    %v207 = vld [vmem:[#allocation7 + $0x1c8] sm:$0xff]
    %v208 = vld [vmem:[#allocation7 + $0x1d0] sm:$0xff]
    %v209 = vld [vmem:[#allocation7 + $0x1d8] sm:$0xff]
    %v210 = vld [vmem:[#allocation7 + $0x1e0] sm:$0xff]
    %v211 = vld [vmem:[#allocation7 + $0x1e8] sm:$0xff]
    %v212 = vld [vmem:[#allocation7 + $0x1f0] sm:$0xff]
    %v213 = vld [vmem:[#allocation7 + $0x1f8] sm:$0xff]
    %v214 = vld [vmem:[#allocation7 + $0x200] sm:$0xff]
    %v215 = vld [vmem:[#allocation7 + $0x208] sm:$0xff]
    %v216 = vld [vmem:[#allocation7 + $0x210] sm:$0xff]
    %v217 = vld [vmem:[#allocation7 + $0x218] sm:$0xff]
    %v218 = vld [vmem:[#allocation7 + $0x220] sm:$0xff]
    %v219 = vld [vmem:[#allocation7 + $0x228] sm:$0xff]
    %v220 = vld [vmem:[#allocation7 + $0x230] sm:$0xff]
    %v221 = vld [vmem:[#allocation7 + $0x238] sm:$0xff]
    %v222 = vld [vmem:[#allocation7 + $0x240] sm:$0xff]
    %v223 = vld [vmem:[#allocation7 + $0x248] sm:$0xff]
    %v224 = vld [vmem:[#allocation7 + $0x250] sm:$0xff]
    %v225 = vld [vmem:[#allocation7 + $0x258] sm:$0xff]
    %v226 = vld [vmem:[#allocation7 + $0x260] sm:$0xff]
    %v227 = vld [vmem:[#allocation7 + $0x268] sm:$0xff]
    %v228 = vld [vmem:[#allocation7 + $0x270] sm:$0xff]
    %v229 = vld [vmem:[#allocation7 + $0x278] sm:$0xff]
    %v230 = vld [vmem:[#allocation7 + $0x280] sm:$0xff]
    %v231 = vld [vmem:[#allocation7 + $0x288] sm:$0xff]
    %v232 = vld [vmem:[#allocation7 + $0x290] sm:$0xff]
    %v233 = vld [vmem:[#allocation7 + $0x298] sm:$0xff]
    %v234 = vld [vmem:[#allocation7 + $0x2a0] sm:$0xff]
    %v235 = vld [vmem:[#allocation7 + $0x2a8] sm:$0xff]
    %v236 = vld [vmem:[#allocation7 + $0x2b0] sm:$0xff]
    %v237 = vld [vmem:[#allocation7 + $0x2b8] sm:$0xff]
    %v238 = vld [vmem:[#allocation7 + $0x2c0] sm:$0xff]
    %v239 = vld [vmem:[#allocation7 + $0x2c8] sm:$0xff]
    %v240 = vld [vmem:[#allocation7 + $0x2d0] sm:$0xff]
    %v241 = vld [vmem:[#allocation7 + $0x2d8] sm:$0xff]
    %v242 = vld [vmem:[#allocation7 + $0x2e0] sm:$0xff]
    %v243 = vld [vmem:[#allocation7 + $0x2e8] sm:$0xff]
    %v244 = vld [vmem:[#allocation7 + $0x2f0] sm:$0xff]
    %v245 = vld [vmem:[#allocation7 + $0x2f8] sm:$0xff]
    %v246 = vld [vmem:[#allocation7 + $0x300] sm:$0xff]
    %v247 = vld [vmem:[#allocation7 + $0x308] sm:$0xff]
    %v248 = vld [vmem:[#allocation7 + $0x310] sm:$0xff]
    %v249 = vld [vmem:[#allocation7 + $0x318] sm:$0xff]
    %v250 = vld [vmem:[#allocation7 + $0x320] sm:$0xff]
    %v251 = vld [vmem:[#allocation7 + $0x328] sm:$0xff]
    %v252 = vld [vmem:[#allocation7 + $0x330] sm:$0xff]
    %v253 = vld [vmem:[#allocation7 + $0x338] sm:$0xff]
    %v254 = vld [vmem:[#allocation7 + $0x340] sm:$0xff]
    %v255 = vld [vmem:[#allocation7 + $0x348] sm:$0xff]
    %v256 = vld [vmem:[#allocation7 + $0x350] sm:$0xff]
    %v257 = vld [vmem:[#allocation7 + $0x358] sm:$0xff]
    %v258 = vld [vmem:[#allocation7 + $0x360] sm:$0xff]
    %v259 = vld [vmem:[#allocation7 + $0x368] sm:$0xff]
    %v260 = vld [vmem:[#allocation7 + $0x370] sm:$0xff]
    %v261 = vld [vmem:[#allocation7 + $0x378] sm:$0xff]
    %v262 = vld [vmem:[#allocation7 + $0x380] sm:$0xff]
    %v263 = vld [vmem:[#allocation7 + $0x388] sm:$0xff]
    %v264 = vld [vmem:[#allocation7 + $0x390] sm:$0xff]
    %v265 = vld [vmem:[#allocation7 + $0x398] sm:$0xff]
    %v266 = vld [vmem:[#allocation7 + $0x3a0] sm:$0xff]
    %v267 = vld [vmem:[#allocation7 + $0x3a8] sm:$0xff]
    %v268 = vld [vmem:[#allocation7 + $0x3b0] sm:$0xff]
    %v269 = vld [vmem:[#allocation7 + $0x3b8] sm:$0xff]
    %v270 = vld [vmem:[#allocation7 + $0x3c0] sm:$0xff]
    %v271 = vld [vmem:[#allocation7 + $0x3c8] sm:$0xff]
    %v272 = vld [vmem:[#allocation7 + $0x3d0] sm:$0xff]
    %v273 = vld [vmem:[#allocation7 + $0x3d8] sm:$0xff]
    %v274 = vld [vmem:[#allocation7 + $0x3e0] sm:$0xff]
    %v275 = vld [vmem:[#allocation7 + $0x3e8] sm:$0xff]
    %v276 = vld [vmem:[#allocation7 + $0x3f0] sm:$0xff]
    %v277 = vld [vmem:[#allocation7 + $0x3f8] sm:$0xff]
    %v278 = vld [vmem:[%s4] sm:$0xf]
    %v280 = vlaneseq
    %v281 = vshrl.u32 %v280, 7
    %v282 = vsub.s32 0, %v281
    %v283 = vrot.slane %v278, %v282
    %v284 = vlaneseq
    %v285 = vshrl.u32 %v284, 7
    %v286 = vsub.s32 1, %v285
    %v287 = vrot.slane %v278, %v286
    %v288 = vlaneseq
    %v289 = vshrl.u32 %v288, 7
    %v290 = vsub.s32 2, %v289
    %v291 = vrot.slane %v278, %v290
    %v292 = vlaneseq
    %v293 = vshrl.u32 %v292, 7
    %v294 = vsub.s32 3, %v293
    %v295 = vrot.slane %v278, %v294
    %v428 = vunpack.c.l.b16 %v150
    %v429 = vunpack.c.h.b16 %v150
    %v430 = vunpack.c.l.b16 %v151
    %v431 = vunpack.c.h.b16 %v151
    %v432 = vunpack.c.l.b16 %v152
    %v433 = vunpack.c.h.b16 %v152
    %v434 = vunpack.c.l.b16 %v153
    %v435 = vunpack.c.h.b16 %v153
    %v436 = vunpack.c.l.b16 %v154
    %v437 = vunpack.c.h.b16 %v154
    %v438 = vunpack.c.l.b16 %v155
    %v439 = vunpack.c.h.b16 %v155
    %v440 = vunpack.c.l.b16 %v156
    %v441 = vunpack.c.h.b16 %v156
    %v442 = vunpack.c.l.b16 %v157
    %v443 = vunpack.c.h.b16 %v157
    %v444 = vunpack.c.l.b16 %v158
    %v445 = vunpack.c.h.b16 %v158
    %v446 = vunpack.c.l.b16 %v159
    %v447 = vunpack.c.h.b16 %v159
    %v448 = vunpack.c.l.b16 %v160
    %v449 = vunpack.c.h.b16 %v160
    %v450 = vunpack.c.l.b16 %v161
    %v451 = vunpack.c.h.b16 %v161
    %v452 = vunpack.c.l.b16 %v162
    %v453 = vunpack.c.h.b16 %v162
    %v454 = vunpack.c.l.b16 %v163
    %v455 = vunpack.c.h.b16 %v163
    %v456 = vunpack.c.l.b16 %v164
    %v457 = vunpack.c.h.b16 %v164
    %v458 = vunpack.c.l.b16 %v165
    %v459 = vunpack.c.h.b16 %v165
    %v460 = vunpack.c.l.b16 %v166
    %v461 = vunpack.c.h.b16 %v166
    %v462 = vunpack.c.l.b16 %v167
    %v463 = vunpack.c.h.b16 %v167
    %v464 = vunpack.c.l.b16 %v168
    %v465 = vunpack.c.h.b16 %v168
    %v466 = vunpack.c.l.b16 %v169
    %v467 = vunpack.c.h.b16 %v169
    %v468 = vunpack.c.l.b16 %v170
    %v469 = vunpack.c.h.b16 %v170
    %v470 = vunpack.c.l.b16 %v171
    %v471 = vunpack.c.h.b16 %v171
    %v472 = vunpack.c.l.b16 %v172
    %v473 = vunpack.c.h.b16 %v172
    %v474 = vunpack.c.l.b16 %v173
    %v475 = vunpack.c.h.b16 %v173
    %v476 = vunpack.c.l.b16 %v174
    %v477 = vunpack.c.h.b16 %v174
    %v478 = vunpack.c.l.b16 %v175
    %v479 = vunpack.c.h.b16 %v175
    %v480 = vunpack.c.l.b16 %v176
    %v481 = vunpack.c.h.b16 %v176
    %v482 = vunpack.c.l.b16 %v177
    %v483 = vunpack.c.h.b16 %v177
    %v484 = vunpack.c.l.b16 %v178
    %v485 = vunpack.c.h.b16 %v178
    %v486 = vunpack.c.l.b16 %v179
    %v487 = vunpack.c.h.b16 %v179
    %v488 = vunpack.c.l.b16 %v180
    %v489 = vunpack.c.h.b16 %v180
    %v490 = vunpack.c.l.b16 %v181
    %v491 = vunpack.c.h.b16 %v181
    %v492 = vunpack.c.l.b16 %v182
    %v493 = vunpack.c.h.b16 %v182
    %v494 = vunpack.c.l.b16 %v183
    %v495 = vunpack.c.h.b16 %v183
    %v496 = vunpack.c.l.b16 %v184
    %v497 = vunpack.c.h.b16 %v184
    %v498 = vunpack.c.l.b16 %v185
    %v499 = vunpack.c.h.b16 %v185
    %v500 = vunpack.c.l.b16 %v186
    %v501 = vunpack.c.h.b16 %v186
    %v502 = vunpack.c.l.b16 %v187
    %v503 = vunpack.c.h.b16 %v187
    %v504 = vunpack.c.l.b16 %v188
    %v505 = vunpack.c.h.b16 %v188
    %v506 = vunpack.c.l.b16 %v189
    %v507 = vunpack.c.h.b16 %v189
    %v508 = vunpack.c.l.b16 %v190
    %v509 = vunpack.c.h.b16 %v190
    %v510 = vunpack.c.l.b16 %v191
    %v511 = vunpack.c.h.b16 %v191
    %v512 = vunpack.c.l.b16 %v192
    %v513 = vunpack.c.h.b16 %v192
    %v514 = vunpack.c.l.b16 %v193
    %v515 = vunpack.c.h.b16 %v193
    %v516 = vunpack.c.l.b16 %v194
    %v517 = vunpack.c.h.b16 %v194
    %v518 = vunpack.c.l.b16 %v195
    %v519 = vunpack.c.h.b16 %v195
    %v520 = vunpack.c.l.b16 %v196
    %v521 = vunpack.c.h.b16 %v196
    %v522 = vunpack.c.l.b16 %v197
    %v523 = vunpack.c.h.b16 %v197
    %v524 = vunpack.c.l.b16 %v198
    %v525 = vunpack.c.h.b16 %v198
    %v526 = vunpack.c.l.b16 %v199
    %v527 = vunpack.c.h.b16 %v199
    %v528 = vunpack.c.l.b16 %v200
    %v529 = vunpack.c.h.b16 %v200
    %v530 = vunpack.c.l.b16 %v201
    %v531 = vunpack.c.h.b16 %v201
    %v532 = vunpack.c.l.b16 %v202
    %v533 = vunpack.c.h.b16 %v202
    %v534 = vunpack.c.l.b16 %v203
    %v535 = vunpack.c.h.b16 %v203
    %v536 = vunpack.c.l.b16 %v204
    %v537 = vunpack.c.h.b16 %v204
    %v538 = vunpack.c.l.b16 %v205
    %v539 = vunpack.c.h.b16 %v205
    %v540 = vunpack.c.l.b16 %v206
    %v541 = vunpack.c.h.b16 %v206
    %v542 = vunpack.c.l.b16 %v207
    %v543 = vunpack.c.h.b16 %v207
    %v544 = vunpack.c.l.b16 %v208
    %v545 = vunpack.c.h.b16 %v208
    %v546 = vunpack.c.l.b16 %v209
    %v547 = vunpack.c.h.b16 %v209
    %v548 = vunpack.c.l.b16 %v210
    %v549 = vunpack.c.h.b16 %v210
    %v550 = vunpack.c.l.b16 %v211
    %v551 = vunpack.c.h.b16 %v211
    %v552 = vunpack.c.l.b16 %v212
    %v553 = vunpack.c.h.b16 %v212
    %v554 = vunpack.c.l.b16 %v213
    %v555 = vunpack.c.h.b16 %v213
    %v556 = vunpack.c.l.b16 %v214
    %v557 = vunpack.c.h.b16 %v214
    %v558 = vunpack.c.l.b16 %v215
    %v559 = vunpack.c.h.b16 %v215
    %v560 = vunpack.c.l.b16 %v216
    %v561 = vunpack.c.h.b16 %v216
    %v562 = vunpack.c.l.b16 %v217
    %v563 = vunpack.c.h.b16 %v217
    %v564 = vunpack.c.l.b16 %v218
    %v565 = vunpack.c.h.b16 %v218
    %v566 = vunpack.c.l.b16 %v219
    %v567 = vunpack.c.h.b16 %v219
    %v568 = vunpack.c.l.b16 %v220
    %v569 = vunpack.c.h.b16 %v220
    %v570 = vunpack.c.l.b16 %v221
    %v571 = vunpack.c.h.b16 %v221
    %v572 = vunpack.c.l.b16 %v222
    %v573 = vunpack.c.h.b16 %v222
    %v574 = vunpack.c.l.b16 %v223
    %v575 = vunpack.c.h.b16 %v223
    %v576 = vunpack.c.l.b16 %v224
    %v577 = vunpack.c.h.b16 %v224
    %v578 = vunpack.c.l.b16 %v225
    %v579 = vunpack.c.h.b16 %v225
    %v580 = vunpack.c.l.b16 %v226
    %v581 = vunpack.c.h.b16 %v226
    %v582 = vunpack.c.l.b16 %v227
    %v583 = vunpack.c.h.b16 %v227
    %v584 = vunpack.c.l.b16 %v228
    %v585 = vunpack.c.h.b16 %v228
    %v586 = vunpack.c.l.b16 %v229
    %v587 = vunpack.c.h.b16 %v229
    %v588 = vunpack.c.l.b16 %v230
    %v589 = vunpack.c.h.b16 %v230
    %v590 = vunpack.c.l.b16 %v231
    %v591 = vunpack.c.h.b16 %v231
    %v592 = vunpack.c.l.b16 %v232
    %v593 = vunpack.c.h.b16 %v232
    %v594 = vunpack.c.l.b16 %v233
    %v595 = vunpack.c.h.b16 %v233
    %v596 = vunpack.c.l.b16 %v234
    %v597 = vunpack.c.h.b16 %v234
    %v598 = vunpack.c.l.b16 %v235
    %v599 = vunpack.c.h.b16 %v235
    %v600 = vunpack.c.l.b16 %v236
    %v601 = vunpack.c.h.b16 %v236
    %v602 = vunpack.c.l.b16 %v237
    %v603 = vunpack.c.h.b16 %v237
    %v604 = vunpack.c.l.b16 %v238
    %v605 = vunpack.c.h.b16 %v238
    %v606 = vunpack.c.l.b16 %v239
    %v607 = vunpack.c.h.b16 %v239
    %v608 = vunpack.c.l.b16 %v240
    %v609 = vunpack.c.h.b16 %v240
    %v610 = vunpack.c.l.b16 %v241
    %v611 = vunpack.c.h.b16 %v241
    %v612 = vunpack.c.l.b16 %v242
    %v613 = vunpack.c.h.b16 %v242
    %v614 = vunpack.c.l.b16 %v243
    %v615 = vunpack.c.h.b16 %v243
    %v616 = vunpack.c.l.b16 %v244
    %v617 = vunpack.c.h.b16 %v244
    %v618 = vunpack.c.l.b16 %v245
    %v619 = vunpack.c.h.b16 %v245
    %v620 = vunpack.c.l.b16 %v246
    %v621 = vunpack.c.h.b16 %v246
    %v622 = vunpack.c.l.b16 %v247
    %v623 = vunpack.c.h.b16 %v247
    %v624 = vunpack.c.l.b16 %v248
    %v625 = vunpack.c.h.b16 %v248
    %v626 = vunpack.c.l.b16 %v249
    %v627 = vunpack.c.h.b16 %v249
    %v628 = vunpack.c.l.b16 %v250
    %v629 = vunpack.c.h.b16 %v250
    %v630 = vunpack.c.l.b16 %v251
    %v631 = vunpack.c.h.b16 %v251
    %v632 = vunpack.c.l.b16 %v252
    %v633 = vunpack.c.h.b16 %v252
    %v634 = vunpack.c.l.b16 %v253
    %v635 = vunpack.c.h.b16 %v253
    %v636 = vunpack.c.l.b16 %v254
    %v637 = vunpack.c.h.b16 %v254
    %v638 = vunpack.c.l.b16 %v255
    %v639 = vunpack.c.h.b16 %v255
    %v640 = vunpack.c.l.b16 %v256
    %v641 = vunpack.c.h.b16 %v256
    %v642 = vunpack.c.l.b16 %v257
    %v643 = vunpack.c.h.b16 %v257
    %v644 = vunpack.c.l.b16 %v258
    %v645 = vunpack.c.h.b16 %v258
    %v646 = vunpack.c.l.b16 %v259
    %v647 = vunpack.c.h.b16 %v259
    %v648 = vunpack.c.l.b16 %v260
    %v649 = vunpack.c.h.b16 %v260
    %v650 = vunpack.c.l.b16 %v261
    %v651 = vunpack.c.h.b16 %v261
    %v652 = vunpack.c.l.b16 %v262
    %v653 = vunpack.c.h.b16 %v262
    %v654 = vunpack.c.l.b16 %v263
    %v655 = vunpack.c.h.b16 %v263
    %v656 = vunpack.c.l.b16 %v264
    %v657 = vunpack.c.h.b16 %v264
    %v658 = vunpack.c.l.b16 %v265
    %v659 = vunpack.c.h.b16 %v265
    %v660 = vunpack.c.l.b16 %v266
    %v661 = vunpack.c.h.b16 %v266
    %v662 = vunpack.c.l.b16 %v267
    %v663 = vunpack.c.h.b16 %v267
    %v664 = vunpack.c.l.b16 %v268
    %v665 = vunpack.c.h.b16 %v268
    %v666 = vunpack.c.l.b16 %v269
    %v667 = vunpack.c.h.b16 %v269
    %v668 = vunpack.c.l.b16 %v270
    %v669 = vunpack.c.h.b16 %v270
    %v670 = vunpack.c.l.b16 %v271
    %v671 = vunpack.c.h.b16 %v271
    %v672 = vunpack.c.l.b16 %v272
    %v673 = vunpack.c.h.b16 %v272
    %v674 = vunpack.c.l.b16 %v273
    %v675 = vunpack.c.h.b16 %v273
    %v676 = vunpack.c.l.b16 %v274
    %v677 = vunpack.c.h.b16 %v274
    %v678 = vunpack.c.l.b16 %v275
    %v679 = vunpack.c.h.b16 %v275
    %v680 = vunpack.c.l.b16 %v276
    %v681 = vunpack.c.h.b16 %v276
    %v682 = vunpack.c.l.b16 %v277
    %v683 = vunpack.c.h.b16 %v277
    %v684 = vpack.c.b16 %v432, %v428
    %v685 = vpack.c.b16 %v433, %v429
    %v686 = vpack.c.b16 %v434, %v430
    %v687 = vpack.c.b16 %v435, %v431
    %v688 = vpack.c.b16 %v440, %v436
    %v689 = vpack.c.b16 %v441, %v437
    %v690 = vpack.c.b16 %v442, %v438
    %v691 = vpack.c.b16 %v443, %v439
    %v692 = vpack.c.b16 %v448, %v444
    %v693 = vpack.c.b16 %v449, %v445
    %v694 = vpack.c.b16 %v450, %v446
    %v695 = vpack.c.b16 %v451, %v447
    %v696 = vpack.c.b16 %v456, %v452
    %v697 = vpack.c.b16 %v457, %v453
    %v698 = vpack.c.b16 %v458, %v454
    %v699 = vpack.c.b16 %v459, %v455
    %v700 = vpack.c.b16 %v464, %v460
    %v701 = vpack.c.b16 %v465, %v461
    %v702 = vpack.c.b16 %v466, %v462
    %v703 = vpack.c.b16 %v467, %v463
    %v704 = vpack.c.b16 %v472, %v468
    %v705 = vpack.c.b16 %v473, %v469
    %v706 = vpack.c.b16 %v474, %v470
    %v707 = vpack.c.b16 %v475, %v471
    %v708 = vpack.c.b16 %v480, %v476
    %v709 = vpack.c.b16 %v481, %v477
    %v710 = vpack.c.b16 %v482, %v478
    %v711 = vpack.c.b16 %v483, %v479
    %v712 = vpack.c.b16 %v488, %v484
    %v713 = vpack.c.b16 %v489, %v485
    %v714 = vpack.c.b16 %v490, %v486
    %v715 = vpack.c.b16 %v491, %v487
    %v716 = vpack.c.b16 %v496, %v492
    %v717 = vpack.c.b16 %v497, %v493
    %v718 = vpack.c.b16 %v498, %v494
    %v719 = vpack.c.b16 %v499, %v495
    %v720 = vpack.c.b16 %v504, %v500
    %v721 = vpack.c.b16 %v505, %v501
    %v722 = vpack.c.b16 %v506, %v502
    %v723 = vpack.c.b16 %v507, %v503
    %v724 = vpack.c.b16 %v512, %v508
    %v725 = vpack.c.b16 %v513, %v509
    %v726 = vpack.c.b16 %v514, %v510
    %v727 = vpack.c.b16 %v515, %v511
    %v728 = vpack.c.b16 %v520, %v516
    %v729 = vpack.c.b16 %v521, %v517
    %v730 = vpack.c.b16 %v522, %v518
    %v731 = vpack.c.b16 %v523, %v519
    %v732 = vpack.c.b16 %v528, %v524
    %v733 = vpack.c.b16 %v529, %v525
    %v734 = vpack.c.b16 %v530, %v526
    %v735 = vpack.c.b16 %v531, %v527
    %v736 = vpack.c.b16 %v536, %v532
    %v737 = vpack.c.b16 %v537, %v533
    %v738 = vpack.c.b16 %v538, %v534
    %v739 = vpack.c.b16 %v539, %v535
    %v740 = vpack.c.b16 %v544, %v540
    %v741 = vpack.c.b16 %v545, %v541
    %v742 = vpack.c.b16 %v546, %v542
    %v743 = vpack.c.b16 %v547, %v543
    %v744 = vpack.c.b16 %v552, %v548
    %v745 = vpack.c.b16 %v553, %v549
    %v746 = vpack.c.b16 %v554, %v550
    %v747 = vpack.c.b16 %v555, %v551
    %v748 = vpack.c.b16 %v560, %v556
    %v749 = vpack.c.b16 %v561, %v557
    %v750 = vpack.c.b16 %v562, %v558
    %v751 = vpack.c.b16 %v563, %v559
    %v752 = vpack.c.b16 %v568, %v564
    %v753 = vpack.c.b16 %v569, %v565
    %v754 = vpack.c.b16 %v570, %v566
    %v755 = vpack.c.b16 %v571, %v567
    %v756 = vpack.c.b16 %v576, %v572
    %v757 = vpack.c.b16 %v577, %v573
    %v758 = vpack.c.b16 %v578, %v574
    %v759 = vpack.c.b16 %v579, %v575
    %v760 = vpack.c.b16 %v584, %v580
    %v761 = vpack.c.b16 %v585, %v581
    %v762 = vpack.c.b16 %v586, %v582
    %v763 = vpack.c.b16 %v587, %v583
    %v764 = vpack.c.b16 %v592, %v588
    %v765 = vpack.c.b16 %v593, %v589
    %v766 = vpack.c.b16 %v594, %v590
    %v767 = vpack.c.b16 %v595, %v591
    %v768 = vpack.c.b16 %v600, %v596
    %v769 = vpack.c.b16 %v601, %v597
    %v770 = vpack.c.b16 %v602, %v598
    %v771 = vpack.c.b16 %v603, %v599
    %v772 = vpack.c.b16 %v608, %v604
    %v773 = vpack.c.b16 %v609, %v605
    %v774 = vpack.c.b16 %v610, %v606
    %v775 = vpack.c.b16 %v611, %v607
    %v776 = vpack.c.b16 %v616, %v612
    %v777 = vpack.c.b16 %v617, %v613
    %v778 = vpack.c.b16 %v618, %v614
    %v779 = vpack.c.b16 %v619, %v615
    %v780 = vpack.c.b16 %v624, %v620
    %v781 = vpack.c.b16 %v625, %v621
    %v782 = vpack.c.b16 %v626, %v622
    %v783 = vpack.c.b16 %v627, %v623
    %v784 = vpack.c.b16 %v632, %v628
    %v785 = vpack.c.b16 %v633, %v629
    %v786 = vpack.c.b16 %v634, %v630
    %v787 = vpack.c.b16 %v635, %v631
    %v788 = vpack.c.b16 %v640, %v636
    %v789 = vpack.c.b16 %v641, %v637
    %v790 = vpack.c.b16 %v642, %v638
    %v791 = vpack.c.b16 %v643, %v639
    %v792 = vpack.c.b16 %v648, %v644
    %v793 = vpack.c.b16 %v649, %v645
    %v794 = vpack.c.b16 %v650, %v646
    %v795 = vpack.c.b16 %v651, %v647
    %v796 = vpack.c.b16 %v656, %v652
    %v797 = vpack.c.b16 %v657, %v653
    %v798 = vpack.c.b16 %v658, %v654
    %v799 = vpack.c.b16 %v659, %v655
    %v800 = vpack.c.b16 %v664, %v660
    %v801 = vpack.c.b16 %v665, %v661
    %v802 = vpack.c.b16 %v666, %v662
    %v803 = vpack.c.b16 %v667, %v663
    %v804 = vpack.c.b16 %v672, %v668
    %v805 = vpack.c.b16 %v673, %v669
    %v806 = vpack.c.b16 %v674, %v670
    %v807 = vpack.c.b16 %v675, %v671
    %v808 = vpack.c.b16 %v680, %v676
    %v809 = vpack.c.b16 %v681, %v677
    %v810 = vpack.c.b16 %v682, %v678
    %v811 = vpack.c.b16 %v683, %v679
    %940 = vmatprep.subr.bf16.mxu0 %v685
    %941 = vmatpush1.bf16.msra.mxu0 %v684
    %942 = vmatprep.subr.bf16.mxu0 %v689
    %943 = vmatpush1.bf16.msra.mxu0 %v688
    %944 = vmatprep.subr.bf16.mxu0 %v693
    %945 = vmatpush1.bf16.msra.mxu0 %v692
    %946 = vmatprep.subr.bf16.mxu0 %v697
    %947 = vmatpush1.bf16.msra.mxu0 %v696
    %948 = vmatprep.subr.bf16.mxu0 %v701
    %949 = vmatpush1.bf16.msra.mxu0 %v700
    %950 = vmatprep.subr.bf16.mxu0 %v705
    %951 = vmatpush1.bf16.msra.mxu0 %v704
    %952 = vmatprep.subr.bf16.mxu0 %v709
    %953 = vmatpush1.bf16.msra.mxu0 %v708
    %954 = vmatprep.subr.bf16.mxu0 %v713
    %955 = vmatpush1.bf16.msra.mxu0 %v712
    %956 = vmatprep.subr.bf16.mxu0 %v717
    %957 = vmatpush1.bf16.msra.mxu0 %v716
    %958 = vmatprep.subr.bf16.mxu0 %v721
    %959 = vmatpush1.bf16.msra.mxu0 %v720
    %960 = vmatprep.subr.bf16.mxu0 %v725
    %961 = vmatpush1.bf16.msra.mxu0 %v724
    %962 = vmatprep.subr.bf16.mxu0 %v729
    %963 = vmatpush1.bf16.msra.mxu0 %v728
    %964 = vmatprep.subr.bf16.mxu0 %v733
    %965 = vmatpush1.bf16.msra.mxu0 %v732
    %966 = vmatprep.subr.bf16.mxu0 %v737
    %967 = vmatpush1.bf16.msra.mxu0 %v736
    %968 = vmatprep.subr.bf16.mxu0 %v741
    %969 = vmatpush1.bf16.msra.mxu0 %v740
    %970 = vmatprep.subr.bf16.mxu0 %v745
    %971 = vmatpush1.bf16.msra.mxu0 %v744
    %972 = vmatprep.mubr.bf16.mxu0 %v147
    %973 = vmatmul.mubr.bf16.gmra.mrb[0].mxu0 %v146
    %v974 = vpop.f32.mrb[0].mxu0
    %v975 = vadd.f32 %v283, %v974
    %v976 = vpop.f32.mrb[0].mxu0
    %v977 = vadd.f32 %v287, %v976
    %v978 = vpop.f32.mrb[0].mxu0
    %v979 = vadd.f32 %v283, %v978
    %v980 = vpop.f32.mrb[0].mxu0
    %v981 = vadd.f32 %v287, %v980
    %982 = vdwg.mxu0
    %983 = vmatprep.subr.bf16.mxu0 %v749
    %984 = vmatpush1.bf16.msra.mxu0 %v748
    %985 = vmatprep.subr.bf16.mxu0 %v753
    %986 = vmatpush1.bf16.msra.mxu0 %v752
    %987 = vmatprep.subr.bf16.mxu0 %v757
    %988 = vmatpush1.bf16.msra.mxu0 %v756
    %989 = vmatprep.subr.bf16.mxu0 %v761
    %990 = vmatpush1.bf16.msra.mxu0 %v760
    %991 = vmatprep.subr.bf16.mxu0 %v765
    %992 = vmatpush1.bf16.msra.mxu0 %v764
    %993 = vmatprep.subr.bf16.mxu0 %v769
    %994 = vmatpush1.bf16.msra.mxu0 %v768
    %995 = vmatprep.subr.bf16.mxu0 %v773
    %996 = vmatpush1.bf16.msra.mxu0 %v772
    %997 = vmatprep.subr.bf16.mxu0 %v777
    %998 = vmatpush1.bf16.msra.mxu0 %v776
    %999 = vmatprep.subr.bf16.mxu0 %v781
    %1000 = vmatpush1.bf16.msra.mxu0 %v780
    %1001 = vmatprep.subr.bf16.mxu0 %v785
    %1002 = vmatpush1.bf16.msra.mxu0 %v784
    %1003 = vmatprep.subr.bf16.mxu0 %v789
    %1004 = vmatpush1.bf16.msra.mxu0 %v788
    %1005 = vmatprep.subr.bf16.mxu0 %v793
    %1006 = vmatpush1.bf16.msra.mxu0 %v792
    %1007 = vmatprep.subr.bf16.mxu0 %v797
    %1008 = vmatpush1.bf16.msra.mxu0 %v796
    %1009 = vmatprep.subr.bf16.mxu0 %v801
    %1010 = vmatpush1.bf16.msra.mxu0 %v800
    %1011 = vmatprep.subr.bf16.mxu0 %v805
    %1012 = vmatpush1.bf16.msra.mxu0 %v804
    %1013 = vmatprep.subr.bf16.mxu0 %v809
    %1014 = vmatpush1.bf16.msra.mxu0 %v808
    %1015 = vmatprep.mubr.bf16.mxu0 %v149
    %1016 = vmatmul.mubr.bf16.gmra.mrb[0].mxu0 %v148
    %v1017 = vpop.f32.mrb[0].mxu0
    %v1018 = vadd.f32 %v975, %v1017
    %v1019 = vpop.f32.mrb[0].mxu0
    %v1020 = vadd.f32 %v977, %v1019
    %v1021 = vpop.f32.mrb[0].mxu0
    %v1022 = vadd.f32 %v979, %v1021
    %v1023 = vpop.f32.mrb[0].mxu0
    %v1024 = vadd.f32 %v981, %v1023
    %1025 = vdwg.mxu0
    %1026 = vmatprep.subr.bf16.mxu0 %v687
    %1027 = vmatpush1.bf16.msra.mxu0 %v686
    %1028 = vmatprep.subr.bf16.mxu0 %v691
    %1029 = vmatpush1.bf16.msra.mxu0 %v690
    %1030 = vmatprep.subr.bf16.mxu0 %v695
    %1031 = vmatpush1.bf16.msra.mxu0 %v694
    %1032 = vmatprep.subr.bf16.mxu0 %v699
    %1033 = vmatpush1.bf16.msra.mxu0 %v698
    %1034 = vmatprep.subr.bf16.mxu0 %v703
    %1035 = vmatpush1.bf16.msra.mxu0 %v702
    %1036 = vmatprep.subr.bf16.mxu0 %v707
    %1037 = vmatpush1.bf16.msra.mxu0 %v706
    %1038 = vmatprep.subr.bf16.mxu0 %v711
    %1039 = vmatpush1.bf16.msra.mxu0 %v710
    %1040 = vmatprep.subr.bf16.mxu0 %v715
    %1041 = vmatpush1.bf16.msra.mxu0 %v714
    %1042 = vmatprep.subr.bf16.mxu0 %v719
    %1043 = vmatpush1.bf16.msra.mxu0 %v718
    %1044 = vmatprep.subr.bf16.mxu0 %v723
    %1045 = vmatpush1.bf16.msra.mxu0 %v722
    %1046 = vmatprep.subr.bf16.mxu0 %v727
    %1047 = vmatpush1.bf16.msra.mxu0 %v726
    %1048 = vmatprep.subr.bf16.mxu0 %v731
    %1049 = vmatpush1.bf16.msra.mxu0 %v730
    %1050 = vmatprep.subr.bf16.mxu0 %v735
    %1051 = vmatpush1.bf16.msra.mxu0 %v734
    %1052 = vmatprep.subr.bf16.mxu0 %v739
    %1053 = vmatpush1.bf16.msra.mxu0 %v738
    %1054 = vmatprep.subr.bf16.mxu0 %v743
    %1055 = vmatpush1.bf16.msra.mxu0 %v742
    %1056 = vmatprep.subr.bf16.mxu0 %v747
    %1057 = vmatpush1.bf16.msra.mxu0 %v746
    %1058 = vmatprep.mubr.bf16.mxu0 %v147
    %1059 = vmatmul.mubr.bf16.gmra.mrb[0].mxu0 %v146
    %v1060 = vpop.f32.mrb[0].mxu0
    %v1061 = vadd.f32 %v291, %v1060
    %v1062 = vpop.f32.mrb[0].mxu0
    %v1063 = vadd.f32 %v295, %v1062
    %v1064 = vpop.f32.mrb[0].mxu0
    %v1065 = vadd.f32 %v291, %v1064
    %v1066 = vpop.f32.mrb[0].mxu0
    %v1067 = vadd.f32 %v295, %v1066
    %1068 = vdwg.mxu0
    %1069 = vmatprep.subr.bf16.mxu0 %v751
    %1070 = vmatpush1.bf16.msra.mxu0 %v750
    %1071 = vmatprep.subr.bf16.mxu0 %v755
    %1072 = vmatpush1.bf16.msra.mxu0 %v754
    %1073 = vmatprep.subr.bf16.mxu0 %v759
    %1074 = vmatpush1.bf16.msra.mxu0 %v758
    %1075 = vmatprep.subr.bf16.mxu0 %v763
    %1076 = vmatpush1.bf16.msra.mxu0 %v762
    %1077 = vmatprep.subr.bf16.mxu0 %v767
    %1078 = vmatpush1.bf16.msra.mxu0 %v766
    %1079 = vmatprep.subr.bf16.mxu0 %v771
    %1080 = vmatpush1.bf16.msra.mxu0 %v770
    %1081 = vmatprep.subr.bf16.mxu0 %v775
    %1082 = vmatpush1.bf16.msra.mxu0 %v774
    %1083 = vmatprep.subr.bf16.mxu0 %v779
    %1084 = vmatpush1.bf16.msra.mxu0 %v778
    %1085 = vmatprep.subr.bf16.mxu0 %v783
    %1086 = vmatpush1.bf16.msra.mxu0 %v782
    %1087 = vmatprep.subr.bf16.mxu0 %v787
    %1088 = vmatpush1.bf16.msra.mxu0 %v786
    %1089 = vmatprep.subr.bf16.mxu0 %v791
    %1090 = vmatpush1.bf16.msra.mxu0 %v790
    %1091 = vmatprep.subr.bf16.mxu0 %v795
    %1092 = vmatpush1.bf16.msra.mxu0 %v794
    %1093 = vmatprep.subr.bf16.mxu0 %v799
    %1094 = vmatpush1.bf16.msra.mxu0 %v798
    %1095 = vmatprep.subr.bf16.mxu0 %v803
    %1096 = vmatpush1.bf16.msra.mxu0 %v802
    %1097 = vmatprep.subr.bf16.mxu0 %v807
    %1098 = vmatpush1.bf16.msra.mxu0 %v806
    %1099 = vmatprep.subr.bf16.mxu0 %v811
    %1100 = vmatpush1.bf16.msra.mxu0 %v810
    %1101 = vmatprep.mubr.bf16.mxu0 %v149
    %1102 = vmatmul.mubr.bf16.gmra.mrb[0].mxu0 %v148
    %v1103 = vpop.f32.mrb[0].mxu0
    %v1104 = vadd.f32 %v1061, %v1103
    %v1105 = vpop.f32.mrb[0].mxu0
    %v1106 = vadd.f32 %v1063, %v1105
    %v1107 = vpop.f32.mrb[0].mxu0
    %v1108 = vadd.f32 %v1065, %v1107
    %v1109 = vpop.f32.mrb[0].mxu0
    %v1110 = vadd.f32 %v1067, %v1109
    %1111 = vdwg.mxu0
    %v1112 = vadd.f32 %v51, %v1018
    %v1113 = vadd.f32 %v52, %v1020
    %v1114 = vadd.f32 %v53, %v1104
    %v1115 = vadd.f32 %v54, %v1106
    %v1116 = vadd.f32 %v55, %v1022
    %v1117 = vadd.f32 %v56, %v1024
    %v1118 = vadd.f32 %v57, %v1108
    %v1119 = vadd.f32 %v58, %v1110
    %1120 = vst [vmem:[#allocation9] sm:$0xff] %v1112
    %1121 = vst [vmem:[#allocation9 + $0x8] sm:$0xff] %v1113
    %1122 = vst [vmem:[#allocation9 + $0x10] sm:$0xff] %v1114
    %1123 = vst [vmem:[#allocation9 + $0x18] sm:$0xff] %v1115
    %1124 = vst [vmem:[#allocation9 + $0x20] sm:$0xff] %v1116
    %1125 = vst [vmem:[#allocation9 + $0x28] sm:$0xff] %v1117
    %1126 = vst [vmem:[#allocation9 + $0x30] sm:$0xff] %v1118
    %1127 = vst [vmem:[#allocation9 + $0x38] sm:$0xff] %v1119
    // Predicated region
    $region30: #{tpu_custom_call.1} parent=1 // pred_check
      _
    $region31: #{tpu_custom_call.1} parent=1 // pred_check_branch
      %1129 = sbr.rel (0) target = $region33
    $region32: #{tpu_custom_call.1} parent=1 // pred_region
      %s1131 = ssub.s32 1024, 1024
      %1132 = vsyncadd [#allocation6], %s1131
      %s1133 = sshll.u32 [#allocation9], 4
      %s1134 = int_to_ptr.vmem [resolvable:$true] %s1133
      %1139 = dma.vmem_to_hbm [thread:$0]  %s1134, 1024, %s5, [#allocation6], 512, 512, 32
    $region33: #{tpu_custom_call.1} parent=1 // pred_fallthru
      _
    // Predicated region
    $region34: #{tpu_custom_call.1} parent=1 // pred_check
      _
    $region35: #{tpu_custom_call.1} parent=1 // pred_check_branch
      %1141 = sbr.rel (0) target = $region37
    $region36: #{tpu_custom_call.1} parent=1 // pred_region
      %1142 = dma.done [#allocation6], 1024
    $region37: #{tpu_custom_call.1} parent=1 // pred_fallthru
      _
    %1143 = vsyncpa [#allocation5], 1
    %1144 = vsyncpa [#allocation8], 1
    %1145 = vsyncpa [#allocation6], 1

</llo_original>
